<compile_context>
chip_gen: v7x
topology: tpu7x:2x2x1
jax: 0.10.0
libtpu: 0.0.40
codegen_flags: <defaults>
</compile_context>

<pallas_src>
import functools

import jax
import jax.numpy as jnp
from jax import lax
from jax.experimental import pallas as pl
from jax.experimental.pallas import tpu as pltpu


def _net_fused_kernel(*refs, heads, dims):
    """Fused NET forward.

    refs = (feat_ref, adj_ref,
            w_0, al_blk_0, ar_blk_0, ..., w_L, al_blk_L, ar_blk_L,
            out_ref)

    feat_ref:  (N, F_in)          input node features
    adj_ref:   (N, N)             adj[v, u] = 1. iff edge u -> v
    w_l:       (F_in_l, H_l*D_l)  shared linear projection of layer l
    al_blk_l:  (H_l, H_l*D_l)     attn_l[h] placed in columns [h*D, (h+1)*D)
    ar_blk_l:  (H_l*D_l, H_l)     attn_r[h] placed in rows    [h*D, (h+1)*D)
    out_ref:   (N, n_classes)     head-mean of last GAT layer
    """
    feat_ref, adj_ref = refs[0], refs[1]
    out_ref = refs[-1]
    param_refs = refs[2:-1]
    n_layers = len(heads)
    assert len(param_refs) == 3 * n_layers

    adj = adj_ref[...].astype(jnp.float32)
    n = adj.shape[0]

    # One stacked boolean edge mask per distinct head count, reused for both
    # the -inf masking and the zeroing of p.
    mask_stacks = {}
    for hc in sorted(set(heads)):
        adj_s = jnp.concatenate([adj] * hc, axis=0) if hc > 1 else adj
        mask_stacks[hc] = adj_s > jnp.float32(0.0)

    h = feat_ref[...].astype(jnp.float32)

    for l in range(n_layers):
        H, D = heads[l], dims[l]
        w_ref, al_ref, ar_ref = param_refs[3 * l:3 * l + 3]

        # Feature projection for all heads (MXU, bf16 inputs, f32 accumulate).
        hb = h.astype(jnp.bfloat16)
        wb = w_ref[...].astype(jnp.bfloat16)
        z = jnp.dot(hb, wb, preferred_element_type=jnp.float32)      # (N, H*D)
        zb = z.astype(jnp.bfloat16)

        albb = al_ref[...].astype(jnp.bfloat16)                      # (H, H*D)
        arbb = ar_ref[...].astype(jnp.bfloat16)                      # (H*D, H)

        # Attention logits for all heads via MXU (no XLU reductions):
        #   el[h, u] = sum_d attn_l[h,d] * z[u, h*D+d]   (A @ B^T form)
        #   er[v, h] = sum_d attn_r[h,d] * z[v, h*D+d]   (standard matmul)
        el = lax.dot_general(albb, zb, (((1,), (1,)), ((), ())),
                             preferred_element_type=jnp.float32)     # (H, N)
        er = jnp.dot(zb, arbb, preferred_element_type=jnp.float32)   # (N, H)

        # Stack heads along sublanes: row index = head*N + v.
        el_stack = jnp.concatenate(
            [jnp.broadcast_to(el[hh:hh + 1, :], (n, n)) for hh in range(H)],
            axis=0)                                                  # (H*N, N)
        er_stack = jnp.concatenate(
            [er[:, hh:hh + 1] for hh in range(H)], axis=0)           # (H*N, 1)
        mask = mask_stacks[H]                                        # (H*N, N)

        # scores[h*N+v, u] = LeakyReLU(el[h,u] + er[v,h]), masked softmax over u.
        s = el_stack + er_stack
        s = jnp.where(s > 0, s, jnp.float32(0.2) * s)                # LeakyReLU(0.2)
        s = jnp.where(mask, s, jnp.float32(-1e30))
        m = jnp.max(s, axis=-1, keepdims=True)
        p = jnp.where(mask, jnp.exp(s - m), jnp.float32(0.0))
        denom = jnp.sum(p, axis=-1, keepdims=True)
        inv = pl.reciprocal(jnp.maximum(denom, jnp.float32(1e-20)), approx=True)
        alpha = p * inv                                              # (H*N, N)

        # Aggregation for all heads in one MXU pass; keep the diagonal
        # (own-head) blocks -> concatenated-head layout == flatten(1).
        out_full = jnp.dot(alpha.astype(jnp.bfloat16), zb,
                           preferred_element_type=jnp.float32)       # (H*N, H*D)
        h = jnp.concatenate(
            [out_full[hh * n:(hh + 1) * n, hh * D:(hh + 1) * D] for hh in range(H)],
            axis=1)                                                  # (N, H*D)

        if l < n_layers - 1:
            # ELU(alpha=1); clamp exp arg so the discarded branch can't be inf.
            h = jnp.where(h > 0, h, jnp.exp(jnp.minimum(h, jnp.float32(0.0))) - 1.0)

    # Final layer: mean over output heads (lane-block sum / H_out).
    h_out, c = heads[-1], dims[-1]
    acc = h[:, 0:c]
    for hh in range(1, h_out):
        acc = acc + h[:, hh * c:(hh + 1) * c]
    out_ref[...] = acc * jnp.float32(1.0 / h_out)


def net_forward(adj, features, params):
    """Pallas implementation of NET.forward(g, features): one fused kernel."""
    n = features.shape[0]
    heads = tuple(p["heads"] for p in params)
    dims = tuple(p["dout"] for p in params)
    inputs = [features, adj]
    for p in params:
        inputs += [p["w"], p["al_blk"], p["ar_blk"]]
    kernel = functools.partial(_net_fused_kernel, heads=heads, dims=dims)
    return pl.pallas_call(
        kernel,
        out_shape=jax.ShapeDtypeStruct((n, dims[-1]), jnp.float32),
        in_specs=[pl.BlockSpec(memory_space=pltpu.MemorySpace.VMEM)] * len(inputs),
        out_specs=pl.BlockSpec(memory_space=pltpu.MemorySpace.VMEM),
    )(*inputs)


def init_params(key, in_dim, hidden_dim, num_heads, num_out_heads,
                n_classes, num_layers):
    """Deterministic kaiming-style init (matches kaiming_normal_init intent).

    Hidden layer l: in -> (num_heads, hidden_dim); last: -> (num_out_heads,
    n_classes). Attention vectors are pre-laid-out as block matrices so the
    kernel computes all-head attention logits with MXU matmuls.
    """
    params = []
    fin = in_dim
    for l in range(num_layers + 1):
        last = (l == num_layers)
        hds = num_out_heads if last else num_heads
        dout = n_classes if last else hidden_dim
        key, kw, kl, kr = jax.random.split(key, 4)
        # nn.Linear kaiming_normal_(nonlinearity='sigmoid'): std = 1/sqrt(fan_in)
        w = jax.random.normal(kw, (fin, hds * dout), jnp.float32) / jnp.sqrt(
            jnp.float32(fin))
        attn_l = jax.random.normal(kl, (hds, dout), jnp.float32) * 0.1
        attn_r = jax.random.normal(kr, (hds, dout), jnp.float32) * 0.1
        al_blk = jnp.zeros((hds, hds * dout), jnp.float32)
        ar_blk = jnp.zeros((hds * dout, hds), jnp.float32)
        for hd in range(hds):
            al_blk = al_blk.at[hd, hd * dout:(hd + 1) * dout].set(attn_l[hd])
            ar_blk = ar_blk.at[hd * dout:(hd + 1) * dout, hd].set(attn_r[hd])
        params.append(dict(w=w, al_blk=al_blk, ar_blk=ar_blk,
                           heads=hds, dout=dout))
        fin = hds * dout
    return params


if __name__ == "__main__":
    # Small shapes consistent with the module: graph with N nodes, GAT stack.
    N = 16            # number of nodes
    IN_DIM = 8        # input feature dim
    HIDDEN = 8        # per-head hidden dim
    NUM_HEADS = 2     # args.num_heads
    NUM_OUT_HEADS = 2 # args.num_out_heads
    NUM_LAYERS = 2    # args.num_layers
    N_CLASSES = 5     # self.n_classes

    key = jax.random.PRNGKey(0)
    kf, ka, kp = jax.random.split(key, 3)

    features = jax.random.normal(kf, (N, IN_DIM), jnp.float32)
    # deterministic random graph + self loops; adj[v, u] = edge u -> v
    adj = jax.random.bernoulli(ka, 0.3, (N, N)).astype(jnp.float32)
    adj = jnp.maximum(adj, jnp.eye(N, dtype=jnp.float32))

    params = init_params(kp, IN_DIM, HIDDEN, NUM_HEADS, NUM_OUT_HEADS,
                         N_CLASSES, NUM_LAYERS)

    # TODO(synk): training path (observe/Adam/BCE + LwF distillation losses) is
    # host-side optimizer logic, not part of the forward kernel.
    out = net_forward(adj, features, params)
    out = jax.block_until_ready(out)
    assert out.shape == (N, N_CLASSES), out.shape
    assert bool(jnp.all(jnp.isfinite(out)))
    print("KERNEL_OK")
</pallas_src>

<mosaic_0001>
module attributes {stable_mosaic.version = 11 : i64} {
  func.func @_net_fused_kernel(%arg0: memref<16x8xf32, #tpu.memory_space<vmem>>, %arg1: memref<16x16xf32, #tpu.memory_space<vmem>>, %arg2: memref<8x16xf32, #tpu.memory_space<vmem>>, %arg3: memref<2x16xf32, #tpu.memory_space<vmem>>, %arg4: memref<16x2xf32, #tpu.memory_space<vmem>>, %arg5: memref<16x16xf32, #tpu.memory_space<vmem>>, %arg6: memref<2x16xf32, #tpu.memory_space<vmem>>, %arg7: memref<16x2xf32, #tpu.memory_space<vmem>>, %arg8: memref<16x10xf32, #tpu.memory_space<vmem>>, %arg9: memref<2x10xf32, #tpu.memory_space<vmem>>, %arg10: memref<10x2xf32, #tpu.memory_space<vmem>>, %arg11: memref<16x5xf32, #tpu.memory_space<vmem>>) attributes {dimension_semantics = [], scalar_prefetch = 0 : i64, scratch_operands = 0 : i64, tpu.core_type = #tpu.core_type<tc>} {
    %c0 = arith.constant 0 : index
    %c0_0 = arith.constant 0 : index
    %0 = vector.load %arg1[%c0, %c0_0] : memref<16x16xf32, #tpu.memory_space<vmem>>, vector<16x16xf32>
    %1 = tpu.concatenate %0, %0 in 0 : vector<16x16xf32>, vector<16x16xf32> -> vector<32x16xf32>
    %cst = arith.constant 0.000000e+00 : f32
    %2 = vector.broadcast %cst : f32 to vector<32x16xf32>
    %3 = arith.cmpf ogt, %1, %2 : vector<32x16xf32>
    %c0_1 = arith.constant 0 : index
    %c0_2 = arith.constant 0 : index
    %4 = vector.load %arg0[%c0_1, %c0_2] : memref<16x8xf32, #tpu.memory_space<vmem>>, vector<16x8xf32>
    %5 = arith.truncf %4 : vector<16x8xf32> to vector<16x8xbf16>
    %c0_3 = arith.constant 0 : index
    %c0_4 = arith.constant 0 : index
    %6 = vector.load %arg2[%c0_3, %c0_4] : memref<8x16xf32, #tpu.memory_space<vmem>>, vector<8x16xf32>
    %7 = arith.truncf %6 : vector<8x16xf32> to vector<8x16xbf16>
    %cst_5 = arith.constant dense<0.000000e+00> : vector<16x16xf32>
    %8 = tpu.matmul %5, %7, %cst_5 {dimension_numbers = #tpu.dot_dimension_numbers<[1], [0], [0], [1], [0, 0, 1, 1], [], []>} : vector<16x8xbf16>, vector<8x16xbf16>, vector<16x16xf32> -> vector<16x16xf32>
    %9 = arith.truncf %8 : vector<16x16xf32> to vector<16x16xbf16>
    %c0_6 = arith.constant 0 : index
    %c0_7 = arith.constant 0 : index
    %10 = vector.load %arg3[%c0_6, %c0_7] : memref<2x16xf32, #tpu.memory_space<vmem>>, vector<2x16xf32>
    %11 = arith.truncf %10 : vector<2x16xf32> to vector<2x16xbf16>
    %c0_8 = arith.constant 0 : index
    %c0_9 = arith.constant 0 : index
    %12 = vector.load %arg4[%c0_8, %c0_9] : memref<16x2xf32, #tpu.memory_space<vmem>>, vector<16x2xf32>
    %13 = arith.truncf %12 : vector<16x2xf32> to vector<16x2xbf16>
    %cst_10 = arith.constant dense<0.000000e+00> : vector<2x16xf32>
    %14 = tpu.matmul %11, %9, %cst_10 {dimension_numbers = #tpu.dot_dimension_numbers<[1], [1], [0], [0], [0, 0, 1, 0], [], []>} : vector<2x16xbf16>, vector<16x16xbf16>, vector<2x16xf32> -> vector<2x16xf32>
    %cst_11 = arith.constant dense<0.000000e+00> : vector<16x2xf32>
    %15 = tpu.matmul %9, %13, %cst_11 {dimension_numbers = #tpu.dot_dimension_numbers<[1], [0], [0], [1], [0, 0, 1, 1], [], []>} : vector<16x16xbf16>, vector<16x2xbf16>, vector<16x2xf32> -> vector<16x2xf32>
    %16 = vector.extract_strided_slice %14 {offsets = [0, 0], sizes = [1, 16], strides = [1, 1]} : vector<2x16xf32> to vector<1x16xf32>
    %17 = vector.shape_cast %16 : vector<1x16xf32> to vector<1x16xf32>
    %18 = vector.broadcast %17 : vector<1x16xf32> to vector<16x16xf32>
    %19 = vector.extract_strided_slice %14 {offsets = [1, 0], sizes = [1, 16], strides = [1, 1]} : vector<2x16xf32> to vector<1x16xf32>
    %20 = vector.shape_cast %19 : vector<1x16xf32> to vector<1x16xf32>
    %21 = vector.broadcast %20 : vector<1x16xf32> to vector<16x16xf32>
    %22 = tpu.concatenate %18, %21 in 0 : vector<16x16xf32>, vector<16x16xf32> -> vector<32x16xf32>
    %23 = vector.extract_strided_slice %15 {offsets = [0, 0], sizes = [16, 1], strides = [1, 1]} : vector<16x2xf32> to vector<16x1xf32>
    %24 = vector.extract_strided_slice %15 {offsets = [0, 1], sizes = [16, 1], strides = [1, 1]} : vector<16x2xf32> to vector<16x1xf32>
    %25 = tpu.concatenate %23, %24 in 0 : vector<16x1xf32>, vector<16x1xf32> -> vector<32x1xf32>
    %26 = vector.broadcast %25 : vector<32x1xf32> to vector<32x16xf32>
    %27 = arith.addf %22, %26 : vector<32x16xf32>
    %cst_12 = arith.constant 0.000000e+00 : f32
    %28 = vector.broadcast %cst_12 : f32 to vector<32x16xf32>
    %29 = arith.cmpf ogt, %27, %28 : vector<32x16xf32>
    %cst_13 = arith.constant 2.000000e-01 : f32
    %30 = vector.broadcast %cst_13 : f32 to vector<32x16xf32>
    %31 = arith.mulf %30, %27 : vector<32x16xf32>
    %32 = arith.select %29, %27, %31 : vector<32x16xi1>, vector<32x16xf32>
    %cst_14 = arith.constant -1.000000e+30 : f32
    %33 = vector.broadcast %cst_14 : f32 to vector<32x16xf32>
    %34 = arith.select %3, %32, %33 : vector<32x16xi1>, vector<32x16xf32>
    %cst_15 = arith.constant dense<0xFF800000> : vector<32xf32>
    %35 = vector.multi_reduction <maximumf>, %34, %cst_15 [1] : vector<32x16xf32> to vector<32xf32>
    %36 = vector.shape_cast %35 : vector<32xf32> to vector<32x1xf32>
    %37 = vector.broadcast %36 : vector<32x1xf32> to vector<32x16xf32>
    %38 = arith.subf %34, %37 : vector<32x16xf32>
    %39 = math.exp %38 : vector<32x16xf32>
    %cst_16 = arith.constant 0.000000e+00 : f32
    %40 = vector.broadcast %cst_16 : f32 to vector<32x16xf32>
    %41 = arith.select %3, %39, %40 : vector<32x16xi1>, vector<32x16xf32>
    %cst_17 = arith.constant dense<0.000000e+00> : vector<32xf32>
    %42 = vector.multi_reduction <add>, %41, %cst_17 [1] : vector<32x16xf32> to vector<32xf32>
    %43 = vector.shape_cast %42 : vector<32xf32> to vector<32x1xf32>
    %cst_18 = arith.constant 9.99999968E-21 : f32
    %44 = vector.broadcast %cst_18 : f32 to vector<32x1xf32>
    %45 = arith.maximumf %43, %44 : vector<32x1xf32>
    %46 = tpu.reciprocal %45 {approx = true} : vector<32x1xf32> -> vector<32x1xf32>
    %47 = vector.broadcast %46 : vector<32x1xf32> to vector<32x16xf32>
    %48 = arith.mulf %41, %47 : vector<32x16xf32>
    %49 = arith.truncf %48 : vector<32x16xf32> to vector<32x16xbf16>
    %cst_19 = arith.constant dense<0.000000e+00> : vector<32x16xf32>
    %50 = tpu.matmul %49, %9, %cst_19 {dimension_numbers = #tpu.dot_dimension_numbers<[1], [0], [0], [1], [0, 0, 1, 1], [], []>} : vector<32x16xbf16>, vector<16x16xbf16>, vector<32x16xf32> -> vector<32x16xf32>
    %51 = vector.extract_strided_slice %50 {offsets = [0, 0], sizes = [16, 8], strides = [1, 1]} : vector<32x16xf32> to vector<16x8xf32>
    %52 = vector.extract_strided_slice %50 {offsets = [16, 8], sizes = [16, 8], strides = [1, 1]} : vector<32x16xf32> to vector<16x8xf32>
    %53 = tpu.concatenate %51, %52 in 1 : vector<16x8xf32>, vector<16x8xf32> -> vector<16x16xf32>
    %cst_20 = arith.constant 0.000000e+00 : f32
    %54 = vector.broadcast %cst_20 : f32 to vector<16x16xf32>
    %55 = arith.cmpf ogt, %53, %54 : vector<16x16xf32>
    %cst_21 = arith.constant 0.000000e+00 : f32
    %56 = vector.broadcast %cst_21 : f32 to vector<16x16xf32>
    %57 = arith.minimumf %53, %56 : vector<16x16xf32>
    %58 = math.exp %57 : vector<16x16xf32>
    %cst_22 = arith.constant 1.000000e+00 : f32
    %59 = vector.broadcast %cst_22 : f32 to vector<16x16xf32>
    %60 = arith.subf %58, %59 : vector<16x16xf32>
    %61 = arith.select %55, %53, %60 : vector<16x16xi1>, vector<16x16xf32>
    %62 = arith.truncf %61 : vector<16x16xf32> to vector<16x16xbf16>
    %c0_23 = arith.constant 0 : index
    %c0_24 = arith.constant 0 : index
    %63 = vector.load %arg5[%c0_23, %c0_24] : memref<16x16xf32, #tpu.memory_space<vmem>>, vector<16x16xf32>
    %64 = arith.truncf %63 : vector<16x16xf32> to vector<16x16xbf16>
    %cst_25 = arith.constant dense<0.000000e+00> : vector<16x16xf32>
    %65 = tpu.matmul %62, %64, %cst_25 {dimension_numbers = #tpu.dot_dimension_numbers<[1], [0], [0], [1], [0, 0, 1, 1], [], []>} : vector<16x16xbf16>, vector<16x16xbf16>, vector<16x16xf32> -> vector<16x16xf32>
    %66 = arith.truncf %65 : vector<16x16xf32> to vector<16x16xbf16>
    %c0_26 = arith.constant 0 : index
    %c0_27 = arith.constant 0 : index
    %67 = vector.load %arg6[%c0_26, %c0_27] : memref<2x16xf32, #tpu.memory_space<vmem>>, vector<2x16xf32>
    %68 = arith.truncf %67 : vector<2x16xf32> to vector<2x16xbf16>
    %c0_28 = arith.constant 0 : index
    %c0_29 = arith.constant 0 : index
    %69 = vector.load %arg7[%c0_28, %c0_29] : memref<16x2xf32, #tpu.memory_space<vmem>>, vector<16x2xf32>
    %70 = arith.truncf %69 : vector<16x2xf32> to vector<16x2xbf16>
    %cst_30 = arith.constant dense<0.000000e+00> : vector<2x16xf32>
    %71 = tpu.matmul %68, %66, %cst_30 {dimension_numbers = #tpu.dot_dimension_numbers<[1], [1], [0], [0], [0, 0, 1, 0], [], []>} : vector<2x16xbf16>, vector<16x16xbf16>, vector<2x16xf32> -> vector<2x16xf32>
    %cst_31 = arith.constant dense<0.000000e+00> : vector<16x2xf32>
    %72 = tpu.matmul %66, %70, %cst_31 {dimension_numbers = #tpu.dot_dimension_numbers<[1], [0], [0], [1], [0, 0, 1, 1], [], []>} : vector<16x16xbf16>, vector<16x2xbf16>, vector<16x2xf32> -> vector<16x2xf32>
    %73 = vector.extract_strided_slice %71 {offsets = [0, 0], sizes = [1, 16], strides = [1, 1]} : vector<2x16xf32> to vector<1x16xf32>
    %74 = vector.shape_cast %73 : vector<1x16xf32> to vector<1x16xf32>
    %75 = vector.broadcast %74 : vector<1x16xf32> to vector<16x16xf32>
    %76 = vector.extract_strided_slice %71 {offsets = [1, 0], sizes = [1, 16], strides = [1, 1]} : vector<2x16xf32> to vector<1x16xf32>
    %77 = vector.shape_cast %76 : vector<1x16xf32> to vector<1x16xf32>
    %78 = vector.broadcast %77 : vector<1x16xf32> to vector<16x16xf32>
    %79 = tpu.concatenate %75, %78 in 0 : vector<16x16xf32>, vector<16x16xf32> -> vector<32x16xf32>
    %80 = vector.extract_strided_slice %72 {offsets = [0, 0], sizes = [16, 1], strides = [1, 1]} : vector<16x2xf32> to vector<16x1xf32>
    %81 = vector.extract_strided_slice %72 {offsets = [0, 1], sizes = [16, 1], strides = [1, 1]} : vector<16x2xf32> to vector<16x1xf32>
    %82 = tpu.concatenate %80, %81 in 0 : vector<16x1xf32>, vector<16x1xf32> -> vector<32x1xf32>
    %83 = vector.broadcast %82 : vector<32x1xf32> to vector<32x16xf32>
    %84 = arith.addf %79, %83 : vector<32x16xf32>
    %cst_32 = arith.constant 0.000000e+00 : f32
    %85 = vector.broadcast %cst_32 : f32 to vector<32x16xf32>
    %86 = arith.cmpf ogt, %84, %85 : vector<32x16xf32>
    %cst_33 = arith.constant 2.000000e-01 : f32
    %87 = vector.broadcast %cst_33 : f32 to vector<32x16xf32>
    %88 = arith.mulf %87, %84 : vector<32x16xf32>
    %89 = arith.select %86, %84, %88 : vector<32x16xi1>, vector<32x16xf32>
    %cst_34 = arith.constant -1.000000e+30 : f32
    %90 = vector.broadcast %cst_34 : f32 to vector<32x16xf32>
    %91 = arith.select %3, %89, %90 : vector<32x16xi1>, vector<32x16xf32>
    %cst_35 = arith.constant dense<0xFF800000> : vector<32xf32>
    %92 = vector.multi_reduction <maximumf>, %91, %cst_35 [1] : vector<32x16xf32> to vector<32xf32>
    %93 = vector.shape_cast %92 : vector<32xf32> to vector<32x1xf32>
    %94 = vector.broadcast %93 : vector<32x1xf32> to vector<32x16xf32>
    %95 = arith.subf %91, %94 : vector<32x16xf32>
    %96 = math.exp %95 : vector<32x16xf32>
    %cst_36 = arith.constant 0.000000e+00 : f32
    %97 = vector.broadcast %cst_36 : f32 to vector<32x16xf32>
    %98 = arith.select %3, %96, %97 : vector<32x16xi1>, vector<32x16xf32>
    %cst_37 = arith.constant dense<0.000000e+00> : vector<32xf32>
    %99 = vector.multi_reduction <add>, %98, %cst_37 [1] : vector<32x16xf32> to vector<32xf32>
    %100 = vector.shape_cast %99 : vector<32xf32> to vector<32x1xf32>
    %cst_38 = arith.constant 9.99999968E-21 : f32
    %101 = vector.broadcast %cst_38 : f32 to vector<32x1xf32>
    %102 = arith.maximumf %100, %101 : vector<32x1xf32>
    %103 = tpu.reciprocal %102 {approx = true} : vector<32x1xf32> -> vector<32x1xf32>
    %104 = vector.broadcast %103 : vector<32x1xf32> to vector<32x16xf32>
    %105 = arith.mulf %98, %104 : vector<32x16xf32>
    %106 = arith.truncf %105 : vector<32x16xf32> to vector<32x16xbf16>
    %cst_39 = arith.constant dense<0.000000e+00> : vector<32x16xf32>
    %107 = tpu.matmul %106, %66, %cst_39 {dimension_numbers = #tpu.dot_dimension_numbers<[1], [0], [0], [1], [0, 0, 1, 1], [], []>} : vector<32x16xbf16>, vector<16x16xbf16>, vector<32x16xf32> -> vector<32x16xf32>
    %108 = vector.extract_strided_slice %107 {offsets = [0, 0], sizes = [16, 8], strides = [1, 1]} : vector<32x16xf32> to vector<16x8xf32>
    %109 = vector.extract_strided_slice %107 {offsets = [16, 8], sizes = [16, 8], strides = [1, 1]} : vector<32x16xf32> to vector<16x8xf32>
    %110 = tpu.concatenate %108, %109 in 1 : vector<16x8xf32>, vector<16x8xf32> -> vector<16x16xf32>
    %cst_40 = arith.constant 0.000000e+00 : f32
    %111 = vector.broadcast %cst_40 : f32 to vector<16x16xf32>
    %112 = arith.cmpf ogt, %110, %111 : vector<16x16xf32>
    %cst_41 = arith.constant 0.000000e+00 : f32
    %113 = vector.broadcast %cst_41 : f32 to vector<16x16xf32>
    %114 = arith.minimumf %110, %113 : vector<16x16xf32>
    %115 = math.exp %114 : vector<16x16xf32>
    %cst_42 = arith.constant 1.000000e+00 : f32
    %116 = vector.broadcast %cst_42 : f32 to vector<16x16xf32>
    %117 = arith.subf %115, %116 : vector<16x16xf32>
    %118 = arith.select %112, %110, %117 : vector<16x16xi1>, vector<16x16xf32>
    %119 = arith.truncf %118 : vector<16x16xf32> to vector<16x16xbf16>
    %c0_43 = arith.constant 0 : index
    %c0_44 = arith.constant 0 : index
    %120 = vector.load %arg8[%c0_43, %c0_44] : memref<16x10xf32, #tpu.memory_space<vmem>>, vector<16x10xf32>
    %121 = arith.truncf %120 : vector<16x10xf32> to vector<16x10xbf16>
    %cst_45 = arith.constant dense<0.000000e+00> : vector<16x10xf32>
    %122 = tpu.matmul %119, %121, %cst_45 {dimension_numbers = #tpu.dot_dimension_numbers<[1], [0], [0], [1], [0, 0, 1, 1], [], []>} : vector<16x16xbf16>, vector<16x10xbf16>, vector<16x10xf32> -> vector<16x10xf32>
    %123 = arith.truncf %122 : vector<16x10xf32> to vector<16x10xbf16>
    %c0_46 = arith.constant 0 : index
    %c0_47 = arith.constant 0 : index
    %124 = vector.load %arg9[%c0_46, %c0_47] : memref<2x10xf32, #tpu.memory_space<vmem>>, vector<2x10xf32>
    %125 = arith.truncf %124 : vector<2x10xf32> to vector<2x10xbf16>
    %c0_48 = arith.constant 0 : index
    %c0_49 = arith.constant 0 : index
    %126 = vector.load %arg10[%c0_48, %c0_49] : memref<10x2xf32, #tpu.memory_space<vmem>>, vector<10x2xf32>
    %127 = arith.truncf %126 : vector<10x2xf32> to vector<10x2xbf16>
    %cst_50 = arith.constant dense<0.000000e+00> : vector<2x16xf32>
    %128 = tpu.matmul %125, %123, %cst_50 {dimension_numbers = #tpu.dot_dimension_numbers<[1], [1], [0], [0], [0, 0, 1, 0], [], []>} : vector<2x10xbf16>, vector<16x10xbf16>, vector<2x16xf32> -> vector<2x16xf32>
    %cst_51 = arith.constant dense<0.000000e+00> : vector<16x2xf32>
    %129 = tpu.matmul %123, %127, %cst_51 {dimension_numbers = #tpu.dot_dimension_numbers<[1], [0], [0], [1], [0, 0, 1, 1], [], []>} : vector<16x10xbf16>, vector<10x2xbf16>, vector<16x2xf32> -> vector<16x2xf32>
    %130 = vector.extract_strided_slice %128 {offsets = [0, 0], sizes = [1, 16], strides = [1, 1]} : vector<2x16xf32> to vector<1x16xf32>
    %131 = vector.shape_cast %130 : vector<1x16xf32> to vector<1x16xf32>
    %132 = vector.broadcast %131 : vector<1x16xf32> to vector<16x16xf32>
    %133 = vector.extract_strided_slice %128 {offsets = [1, 0], sizes = [1, 16], strides = [1, 1]} : vector<2x16xf32> to vector<1x16xf32>
    %134 = vector.shape_cast %133 : vector<1x16xf32> to vector<1x16xf32>
    %135 = vector.broadcast %134 : vector<1x16xf32> to vector<16x16xf32>
    %136 = tpu.concatenate %132, %135 in 0 : vector<16x16xf32>, vector<16x16xf32> -> vector<32x16xf32>
    %137 = vector.extract_strided_slice %129 {offsets = [0, 0], sizes = [16, 1], strides = [1, 1]} : vector<16x2xf32> to vector<16x1xf32>
    %138 = vector.extract_strided_slice %129 {offsets = [0, 1], sizes = [16, 1], strides = [1, 1]} : vector<16x2xf32> to vector<16x1xf32>
    %139 = tpu.concatenate %137, %138 in 0 : vector<16x1xf32>, vector<16x1xf32> -> vector<32x1xf32>
    %140 = vector.broadcast %139 : vector<32x1xf32> to vector<32x16xf32>
    %141 = arith.addf %136, %140 : vector<32x16xf32>
    %cst_52 = arith.constant 0.000000e+00 : f32
    %142 = vector.broadcast %cst_52 : f32 to vector<32x16xf32>
    %143 = arith.cmpf ogt, %141, %142 : vector<32x16xf32>
    %cst_53 = arith.constant 2.000000e-01 : f32
    %144 = vector.broadcast %cst_53 : f32 to vector<32x16xf32>
    %145 = arith.mulf %144, %141 : vector<32x16xf32>
    %146 = arith.select %143, %141, %145 : vector<32x16xi1>, vector<32x16xf32>
    %cst_54 = arith.constant -1.000000e+30 : f32
    %147 = vector.broadcast %cst_54 : f32 to vector<32x16xf32>
    %148 = arith.select %3, %146, %147 : vector<32x16xi1>, vector<32x16xf32>
    %cst_55 = arith.constant dense<0xFF800000> : vector<32xf32>
    %149 = vector.multi_reduction <maximumf>, %148, %cst_55 [1] : vector<32x16xf32> to vector<32xf32>
    %150 = vector.shape_cast %149 : vector<32xf32> to vector<32x1xf32>
    %151 = vector.broadcast %150 : vector<32x1xf32> to vector<32x16xf32>
    %152 = arith.subf %148, %151 : vector<32x16xf32>
    %153 = math.exp %152 : vector<32x16xf32>
    %cst_56 = arith.constant 0.000000e+00 : f32
    %154 = vector.broadcast %cst_56 : f32 to vector<32x16xf32>
    %155 = arith.select %3, %153, %154 : vector<32x16xi1>, vector<32x16xf32>
    %cst_57 = arith.constant dense<0.000000e+00> : vector<32xf32>
    %156 = vector.multi_reduction <add>, %155, %cst_57 [1] : vector<32x16xf32> to vector<32xf32>
    %157 = vector.shape_cast %156 : vector<32xf32> to vector<32x1xf32>
    %cst_58 = arith.constant 9.99999968E-21 : f32
    %158 = vector.broadcast %cst_58 : f32 to vector<32x1xf32>
    %159 = arith.maximumf %157, %158 : vector<32x1xf32>
    %160 = tpu.reciprocal %159 {approx = true} : vector<32x1xf32> -> vector<32x1xf32>
    %161 = vector.broadcast %160 : vector<32x1xf32> to vector<32x16xf32>
    %162 = arith.mulf %155, %161 : vector<32x16xf32>
    %163 = arith.truncf %162 : vector<32x16xf32> to vector<32x16xbf16>
    %cst_59 = arith.constant dense<0.000000e+00> : vector<32x10xf32>
    %164 = tpu.matmul %163, %123, %cst_59 {dimension_numbers = #tpu.dot_dimension_numbers<[1], [0], [0], [1], [0, 0, 1, 1], [], []>} : vector<32x16xbf16>, vector<16x10xbf16>, vector<32x10xf32> -> vector<32x10xf32>
    %165 = vector.extract_strided_slice %164 {offsets = [0, 0], sizes = [16, 5], strides = [1, 1]} : vector<32x10xf32> to vector<16x5xf32>
    %166 = vector.extract_strided_slice %164 {offsets = [16, 5], sizes = [16, 5], strides = [1, 1]} : vector<32x10xf32> to vector<16x5xf32>
    %167 = tpu.concatenate %165, %166 in 1 : vector<16x5xf32>, vector<16x5xf32> -> vector<16x10xf32>
    %168 = vector.extract_strided_slice %167 {offsets = [0, 0], sizes = [16, 5], strides = [1, 1]} : vector<16x10xf32> to vector<16x5xf32>
    %169 = vector.extract_strided_slice %167 {offsets = [0, 5], sizes = [16, 5], strides = [1, 1]} : vector<16x10xf32> to vector<16x5xf32>
    %170 = arith.addf %168, %169 : vector<16x5xf32>
    %cst_60 = arith.constant 5.000000e-01 : f32
    %171 = vector.broadcast %cst_60 : f32 to vector<16x5xf32>
    %172 = arith.mulf %170, %171 : vector<16x5xf32>
    %c0_61 = arith.constant 0 : index
    %c0_62 = arith.constant 0 : index
    %173 = vector.load %arg11[%c0_61, %c0_62] : memref<16x5xf32, #tpu.memory_space<vmem>>, vector<16x5xf32>
    tpu.vector_store %arg11[%c0_61, %c0_62], %172 {strides = array<i32>} : memref<16x5xf32, #tpu.memory_space<vmem>>, vector<16x5xf32>,
    return
  }
}

</mosaic_0001>

<llo_original>
// kernel: tpu_custom_call.1
$region0: #{tpu_custom_call.1}
  #allocation0 [shape = 'u32[]', space=smem, size = 0x4, offset = 0x4, fixed_abs, tag = 'smem constant byte address 0x4 - core index']
  #allocation1 [shape = 'u32[144,128]{1,0:T(1,128)}', space=vmem, size = 0x12000, scoped, tag = 'internal scratch']
  %s0 = inlined_call_operand.vmem [shape: f32[16,8], index: 0, kind: input, shape index: {}]
  %s1 = inlined_call_operand.vmem [shape: f32[16,16], index: 1, kind: input, shape index: {}]
  %s2 = inlined_call_operand.vmem [shape: f32[8,16], index: 2, kind: input, shape index: {}]
  %s3 = inlined_call_operand.vmem [shape: f32[2,16], index: 3, kind: input, shape index: {}]
  %s4 = inlined_call_operand.vmem [shape: f32[16,2], index: 4, kind: input, shape index: {}]
  %s5 = inlined_call_operand.vmem [shape: f32[16,16], index: 5, kind: input, shape index: {}]
  %s6 = inlined_call_operand.vmem [shape: f32[2,16], index: 6, kind: input, shape index: {}]
  %s7 = inlined_call_operand.vmem [shape: f32[16,2], index: 7, kind: input, shape index: {}]
  %s8 = inlined_call_operand.vmem [shape: f32[16,10], index: 8, kind: input, shape index: {}]
  %s9 = inlined_call_operand.vmem [shape: f32[2,10], index: 9, kind: input, shape index: {}]
  %s10 = inlined_call_operand.vmem [shape: f32[10,2], index: 10, kind: input, shape index: {}]
  %s11 = inlined_call_operand.vmem [shape: f32[16,5], index: 11, kind: output, shape index: {}]
  %s12 = sld [smem:[#allocation0]]
  $region54: #{tpu_custom_call.1} parent=0
    _
  %s14 = ssub.s32 1, %s12
  %s15 = scalar_select 0, %s14, %s12
  // Predicated region
  $region2: #{tpu_custom_call.1} parent=0 // pred_check
    _
  $region3: #{tpu_custom_call.1} parent=0 // pred_check_branch
    %17 = sbr.rel (0) target = $region5
  $region4: #{tpu_custom_call.1} parent=0 // pred_region
    _
  $region5: #{tpu_custom_call.1} parent=0 // pred_fallthru
    _
  // Predicated region
  $region6: #{tpu_custom_call.1} parent=0 // pred_check
    _
  $region7: #{tpu_custom_call.1} parent=0 // pred_check_branch
    %19 = sbr.rel (0) target = $region9
  $region8: #{tpu_custom_call.1} parent=0 // pred_region
    _
  $region9: #{tpu_custom_call.1} parent=0 // pred_fallthru
    _
  // Predicated region
  $region10: #{tpu_custom_call.1} parent=0 // pred_check
    _
  $region11: #{tpu_custom_call.1} parent=0 // pred_check_branch
    %21 = sbr.rel (0) target = $region13
  $region12: #{tpu_custom_call.1} parent=0 // pred_region
    _
  $region13: #{tpu_custom_call.1} parent=0 // pred_fallthru
    _
  // Predicated region
  $region14: #{tpu_custom_call.1} parent=0 // pred_check
    _
  $region15: #{tpu_custom_call.1} parent=0 // pred_check_branch
    %23 = sbr.rel (0) target = $region17
  $region16: #{tpu_custom_call.1} parent=0 // pred_region
    _
  $region17: #{tpu_custom_call.1} parent=0 // pred_fallthru
    _
  // Predicated region
  $region18: #{tpu_custom_call.1} parent=0 // pred_check
    _
  $region19: #{tpu_custom_call.1} parent=0 // pred_check_branch
    %25 = sbr.rel (0) target = $region21
  $region20: #{tpu_custom_call.1} parent=0 // pred_region
    _
  $region21: #{tpu_custom_call.1} parent=0 // pred_fallthru
    _
  // Predicated region
  $region22: #{tpu_custom_call.1} parent=0 // pred_check
    _
  $region23: #{tpu_custom_call.1} parent=0 // pred_check_branch
    %27 = sbr.rel (0) target = $region25
  $region24: #{tpu_custom_call.1} parent=0 // pred_region
    _
  $region25: #{tpu_custom_call.1} parent=0 // pred_fallthru
    _
  // Predicated region
  $region26: #{tpu_custom_call.1} parent=0 // pred_check
    _
  $region27: #{tpu_custom_call.1} parent=0 // pred_check_branch
    %29 = sbr.rel (0) target = $region29
  $region28: #{tpu_custom_call.1} parent=0 // pred_region
    _
  $region29: #{tpu_custom_call.1} parent=0 // pred_fallthru
    _
  // Predicated region
  $region30: #{tpu_custom_call.1} parent=0 // pred_check
    _
  $region31: #{tpu_custom_call.1} parent=0 // pred_check_branch
    %31 = sbr.rel (0) target = $region33
  $region32: #{tpu_custom_call.1} parent=0 // pred_region
    _
  $region33: #{tpu_custom_call.1} parent=0 // pred_fallthru
    _
  // Predicated region
  $region34: #{tpu_custom_call.1} parent=0 // pred_check
    _
  $region35: #{tpu_custom_call.1} parent=0 // pred_check_branch
    %33 = sbr.rel (0) target = $region37
  $region36: #{tpu_custom_call.1} parent=0 // pred_region
    _
  $region37: #{tpu_custom_call.1} parent=0 // pred_fallthru
    _
  // Predicated region
  $region38: #{tpu_custom_call.1} parent=0 // pred_check
    _
  $region39: #{tpu_custom_call.1} parent=0 // pred_check_branch
    %35 = sbr.rel (0) target = $region41
  $region40: #{tpu_custom_call.1} parent=0 // pred_region
    _
  $region41: #{tpu_custom_call.1} parent=0 // pred_fallthru
    _
  // Predicated region
  $region42: #{tpu_custom_call.1} parent=0 // pred_check
    _
  $region43: #{tpu_custom_call.1} parent=0 // pred_check_branch
    %37 = sbr.rel (0) target = $region45
  $region44: #{tpu_custom_call.1} parent=0 // pred_region
    _
  $region45: #{tpu_custom_call.1} parent=0 // pred_fallthru
    _
  %v39 = vld [vmem:[%s1] sm:$0xff]
  %v40 = vld [vmem:[%s1 + $0x8] sm:$0xff]
  %vm41 = vcmp.gt.f32.partialorder %v39, 0.0
  %vm42 = vcmp.gt.f32.partialorder %v40, 0.0
  %v43 = vld [vmem:[%s0] sm:$0xff]
  %v44 = vld [vmem:[%s0 + $0x8] sm:$0xff]
  %v45 = vpack.c.bf16 %v44, %v43
  %v46 = vld [vmem:[%s2] sm:$0xff]
  %v47 = vpack.c.bf16 %v46, %v46
  %vm48 = vcmask 64512
  %v50 = vsel %vm48, %v45, 0
  %vm52 = vcmask 1043456
  %v54 = vsel %vm52, %v47, 0
  %56 = vmatprep.subr.bf16.mxu0 0
  %57 = vmatpush1.bf16.msra.mxu0 %v54
  %58 = vmatprep.subr.bf16.mxu0 0
  %59 = vmatpush1.bf16.msra.mxu0 0
  %60 = vmatprep.subr.bf16.mxu0 0
  %61 = vmatpush1.bf16.msra.mxu0 0
  %62 = vmatprep.subr.bf16.mxu0 0
  %63 = vmatpush1.bf16.msra.mxu0 0
  %64 = vmatprep.subr.bf16.mxu0 0
  %65 = vmatpush1.bf16.msra.mxu0 0
  %66 = vmatprep.subr.bf16.mxu0 0
  %67 = vmatpush1.bf16.msra.mxu0 0
  %68 = vmatprep.subr.bf16.mxu0 0
  %69 = vmatpush1.bf16.msra.mxu0 0
  %70 = vmatprep.subr.bf16.mxu0 0
  %71 = vmatpush1.bf16.msra.mxu0 0
  %72 = vmatprep.subr.bf16.mxu0 0
  %73 = vmatpush1.bf16.msra.mxu0 0
  %74 = vmatprep.subr.bf16.mxu0 0
  %75 = vmatpush1.bf16.msra.mxu0 0
  %76 = vmatprep.subr.bf16.mxu0 0
  %77 = vmatpush1.bf16.msra.mxu0 0
  %78 = vmatprep.subr.bf16.mxu0 0
  %79 = vmatpush1.bf16.msra.mxu0 0
  %80 = vmatprep.subr.bf16.mxu0 0
  %81 = vmatpush1.bf16.msra.mxu0 0
  %82 = vmatprep.subr.bf16.mxu0 0
  %83 = vmatpush1.bf16.msra.mxu0 0
  %84 = vmatprep.subr.bf16.mxu0 0
  %85 = vmatpush1.bf16.msra.mxu0 0
  %86 = vmatprep.subr.bf16.mxu0 0
  %87 = vmatpush1.bf16.msra.mxu0 0
  %88 = vmatprep.mubr.bf16.mxu0 0
  %89 = vmatmul.mubr.bf16.gmra.mrb[0].mxu0 %v50
  %v90 = vpop.f32.mrb[0].mxu0
  %v91 = vadd.f32 0.0, %v90
  %v92 = vpop.f32.mrb[0].mxu0
  %v93 = vpop.f32.mrb[0].mxu0
  %v94 = vadd.f32 0.0, %v93
  %v95 = vpop.f32.mrb[0].mxu0
  %96 = vdwg.mxu0
  %v97 = vpack.c.bf16 %v94, %v91
  %v98 = vld [vmem:[%s3] sm:$0x3]
  %v99 = vpack.c.bf16 %v98, %v98
  %v100 = vld [vmem:[%s4] sm:$0xff]
  %v101 = vld [vmem:[%s4 + $0x8] sm:$0xff]
  %v102 = vpack.c.bf16 %v101, %v100
  %vm103 = vcmask 130048
  %v105 = vsel %vm103, %v99, 0
  %v108 = vsel %vm103, %v97, 0
  %110 = vmatprep.subr.bf16.mxu0 0
  %111 = vmatpush1.bf16.xpose.msra.mxu0 %v108
  %112 = vmatprep.subr.bf16.mxu0 0
  %113 = vmatpush1.bf16.xpose.msra.mxu0 0
  %114 = vmatprep.subr.bf16.mxu0 0
  %115 = vmatpush1.bf16.xpose.msra.mxu0 0
  %116 = vmatprep.subr.bf16.mxu0 0
  %117 = vmatpush1.bf16.xpose.msra.mxu0 0
  %118 = vmatprep.subr.bf16.mxu0 0
  %119 = vmatpush1.bf16.xpose.msra.mxu0 0
  %120 = vmatprep.subr.bf16.mxu0 0
  %121 = vmatpush1.bf16.xpose.msra.mxu0 0
  %122 = vmatprep.subr.bf16.mxu0 0
  %123 = vmatpush1.bf16.xpose.msra.mxu0 0
  %124 = vmatprep.subr.bf16.mxu0 0
  %125 = vmatpush1.bf16.xpose.msra.mxu0 0
  %126 = vmatprep.subr.bf16.mxu0 0
  %127 = vmatpush1.bf16.xpose.msra.mxu0 0
  %128 = vmatprep.subr.bf16.mxu0 0
  %129 = vmatpush1.bf16.xpose.msra.mxu0 0
  %130 = vmatprep.subr.bf16.mxu0 0
  %131 = vmatpush1.bf16.xpose.msra.mxu0 0
  %132 = vmatprep.subr.bf16.mxu0 0
  %133 = vmatpush1.bf16.xpose.msra.mxu0 0
  %134 = vmatprep.subr.bf16.mxu0 0
  %135 = vmatpush1.bf16.xpose.msra.mxu0 0
  %136 = vmatprep.subr.bf16.mxu0 0
  %137 = vmatpush1.bf16.xpose.msra.mxu0 0
  %138 = vmatprep.subr.bf16.mxu0 0
  %139 = vmatpush1.bf16.xpose.msra.mxu0 0
  %140 = vmatprep.subr.bf16.mxu0 0
  %141 = vmatpush1.bf16.xpose.msra.mxu0 0
  %142 = vmatprep.mubr.bf16.mxu0 0
  %143 = vmatmul.mubr.bf16.gmra.mrb[0].mxu0 %v105
  %v144 = vpop.f32.mrb[0].mxu0
  %v145 = vadd.f32 0.0, %v144
  %v146 = vpop.f32.mrb[0].mxu0
  %v147 = vpop.f32.mrb[0].mxu0
  %v148 = vpop.f32.mrb[0].mxu0
  %149 = vdwg.mxu0
  %150 = vmatprep.subr.bf16.mxu0 0
  %151 = vmatpush1.bf16.msra.mxu0 %v102
  %152 = vmatprep.subr.bf16.mxu0 0
  %153 = vmatpush1.bf16.msra.mxu0 0
  %154 = vmatprep.subr.bf16.mxu0 0
  %155 = vmatpush1.bf16.msra.mxu0 0
  %156 = vmatprep.subr.bf16.mxu0 0
  %157 = vmatpush1.bf16.msra.mxu0 0
  %158 = vmatprep.subr.bf16.mxu0 0
  %159 = vmatpush1.bf16.msra.mxu0 0
  %160 = vmatprep.subr.bf16.mxu0 0
  %161 = vmatpush1.bf16.msra.mxu0 0
  %162 = vmatprep.subr.bf16.mxu0 0
  %163 = vmatpush1.bf16.msra.mxu0 0
  %164 = vmatprep.subr.bf16.mxu0 0
  %165 = vmatpush1.bf16.msra.mxu0 0
  %166 = vmatprep.subr.bf16.mxu0 0
  %167 = vmatpush1.bf16.msra.mxu0 0
  %168 = vmatprep.subr.bf16.mxu0 0
  %169 = vmatpush1.bf16.msra.mxu0 0
  %170 = vmatprep.subr.bf16.mxu0 0
  %171 = vmatpush1.bf16.msra.mxu0 0
  %172 = vmatprep.subr.bf16.mxu0 0
  %173 = vmatpush1.bf16.msra.mxu0 0
  %174 = vmatprep.subr.bf16.mxu0 0
  %175 = vmatpush1.bf16.msra.mxu0 0
  %176 = vmatprep.subr.bf16.mxu0 0
  %177 = vmatpush1.bf16.msra.mxu0 0
  %178 = vmatprep.subr.bf16.mxu0 0
  %179 = vmatpush1.bf16.msra.mxu0 0
  %180 = vmatprep.subr.bf16.mxu0 0
  %181 = vmatpush1.bf16.msra.mxu0 0
  %182 = vmatprep.mubr.bf16.mxu0 0
  %183 = vmatmul.mubr.bf16.gmra.mrb[0].mxu0 %v108
  %v184 = vpop.f32.mrb[0].mxu0
  %v185 = vadd.f32 0.0, %v184
  %v186 = vpop.f32.mrb[0].mxu0
  %v187 = vpop.f32.mrb[0].mxu0
  %v188 = vadd.f32 0.0, %v187
  %v189 = vpop.f32.mrb[0].mxu0
  %190 = vdwg.mxu0
  %v191 = vlaneseq
  %v192 = vshrl.u32 %v191, 7
  %v193 = vsub.s32 0, %v192
  %v194 = vrot.slane %v145, %v193
  %v195 = vlaneseq
  %v196 = vshrl.u32 %v195, 7
  %v197 = vsub.s32 1, %v196
  %v198 = vrot.slane %v145, %v197
  %201 = vrot.lane.b32.xlu0 %v185, 127
  %v202 = vpop.permute.xlu0 %201
  %203 = vrot.lane.b32.xlu0 %v188, 127
  %v204 = vpop.permute.xlu0 %203
  %205 = vset.pattern.permute.xlu0 0
  %206 = vperm.xlu0 %205, %v185
  %v207 = vpop.permute.xlu0 %206
  %209 = vset.pattern.permute.xlu0 0
  %210 = vperm.xlu0 %209, %v188
  %v211 = vpop.permute.xlu0 %210
  %213 = vset.pattern.permute.xlu0 0
  %214 = vperm.xlu0 %213, %v202
  %v215 = vpop.permute.xlu0 %214
  %217 = vset.pattern.permute.xlu0 0
  %218 = vperm.xlu0 %217, %v204
  %v219 = vpop.permute.xlu0 %218
  %v221 = vadd.f32 %v194, %v207
  %v222 = vadd.f32 %v194, %v211
  %v223 = vadd.f32 %v198, %v215
  %v224 = vadd.f32 %v198, %v219
  %vm225 = vcmp.gt.f32.partialorder %v221, 0.0
  %vm226 = vcmp.gt.f32.partialorder %v222, 0.0
  %vm227 = vcmp.gt.f32.partialorder %v223, 0.0
  %vm228 = vcmp.gt.f32.partialorder %v224, 0.0
  %v229 = vmul.f32 %v221, 0.2
  %v230 = vmul.f32 %v222, 0.2
  %v231 = vmul.f32 %v223, 0.2
  %v232 = vmul.f32 %v224, 0.2
  %v233 = vsel %vm225, %v221, %v229
  %v234 = vsel %vm226, %v222, %v230
  %v235 = vsel %vm227, %v223, %v231
  %v236 = vsel %vm228, %v224, %v232
  %v237 = vsel %vm41, %v233, -1e+30
  %v238 = vsel %vm42, %v234, -1e+30
  %v239 = vsel %vm41, %v235, -1e+30
  %v240 = vsel %vm42, %v236, -1e+30
  %v241 = vsel %vm103, %v237, -inf
  %242 = vmax.xlane.f32.xlu0 %v241
  %v243 = vpop.xlane.xlu0 %242
  %v244 = vsel %vm103, %v238, -inf
  %245 = vmax.xlane.f32.xlu0 %v244
  %v246 = vpop.xlane.xlu0 %245
  %v247 = vsel %vm103, %v239, -inf
  %248 = vmax.xlane.f32.xlu0 %v247
  %v249 = vpop.xlane.xlu0 %248
  %v250 = vsel %vm103, %v240, -inf
  %251 = vmax.xlane.f32.xlu0 %v250
  %v252 = vpop.xlane.xlu0 %251
  %v253 = vsub.f32 %v237, %v243
  %v254 = vsub.f32 %v238, %v246
  %v255 = vsub.f32 %v239, %v249
  %v256 = vsub.f32 %v240, %v252
  %v257 = vmul.f32 %v253, 1.442695
  %v258 = vpow.pop %v257
  %v259 = vmul.f32 %v254, 1.442695
  %v260 = vpow.pop %v259
  %v261 = vmul.f32 %v255, 1.442695
  %v262 = vpow.pop %v261
  %v263 = vmul.f32 %v256, 1.442695
  %v264 = vpow.pop %v263
  %v265 = vsel %vm41, %v258, 0.0
  %v266 = vsel %vm42, %v260, 0.0
  %v267 = vsel %vm41, %v262, 0.0
  %v268 = vsel %vm42, %v264, 0.0
  %v269 = vsel %vm103, %v265, 0.0
  %270 = vadd.xlane.f32.xlu0 %v269
  %v271 = vpop.xlane.xlu0 %270
  %v272 = vsel %vm103, %v266, 0.0
  %273 = vadd.xlane.f32.xlu0 %v272
  %v274 = vpop.xlane.xlu0 %273
  %v275 = vsel %vm103, %v267, 0.0
  %276 = vadd.xlane.f32.xlu0 %v275
  %v277 = vpop.xlane.xlu0 %276
  %v278 = vsel %vm103, %v268, 0.0
  %279 = vadd.xlane.f32.xlu0 %v278
  %v280 = vpop.xlane.xlu0 %279
  %v281 = vmax.f32 %v271, 1e-20
  %v282 = vmax.f32 %v274, 1e-20
  %v283 = vmax.f32 %v277, 1e-20
  %v284 = vmax.f32 %v280, 1e-20
  %v285 = vrcp.pop %v281
  %v286 = vrcp.pop %v282
  %v287 = vrcp.pop %v283
  %v288 = vrcp.pop %v284
  %v289 = vmul.f32 %v265, %v285
  %v290 = vmul.f32 %v266, %v286
  %v291 = vmul.f32 %v267, %v287
  %v292 = vmul.f32 %v268, %v288
  %v293 = vpack.c.bf16 %v290, %v289
  %v294 = vpack.c.bf16 %v292, %v291
  %v296 = vsel %vm103, %v293, 0
  %v299 = vsel %vm103, %v294, 0
  %301 = vmatprep.subr.bf16.mxu0 0
  %302 = vmatpush1.bf16.msra.mxu0 %v97
  %303 = vmatprep.subr.bf16.mxu0 0
  %304 = vmatpush1.bf16.msra.mxu0 0
  %305 = vmatprep.subr.bf16.mxu0 0
  %306 = vmatpush1.bf16.msra.mxu0 0
  %307 = vmatprep.subr.bf16.mxu0 0
  %308 = vmatpush1.bf16.msra.mxu0 0
  %309 = vmatprep.subr.bf16.mxu0 0
  %310 = vmatpush1.bf16.msra.mxu0 0
  %311 = vmatprep.subr.bf16.mxu0 0
  %312 = vmatpush1.bf16.msra.mxu0 0
  %313 = vmatprep.subr.bf16.mxu0 0
  %314 = vmatpush1.bf16.msra.mxu0 0
  %315 = vmatprep.subr.bf16.mxu0 0
  %316 = vmatpush1.bf16.msra.mxu0 0
  %317 = vmatprep.subr.bf16.mxu0 0
  %318 = vmatpush1.bf16.msra.mxu0 0
  %319 = vmatprep.subr.bf16.mxu0 0
  %320 = vmatpush1.bf16.msra.mxu0 0
  %321 = vmatprep.subr.bf16.mxu0 0
  %322 = vmatpush1.bf16.msra.mxu0 0
  %323 = vmatprep.subr.bf16.mxu0 0
  %324 = vmatpush1.bf16.msra.mxu0 0
  %325 = vmatprep.subr.bf16.mxu0 0
  %326 = vmatpush1.bf16.msra.mxu0 0
  %327 = vmatprep.subr.bf16.mxu0 0
  %328 = vmatpush1.bf16.msra.mxu0 0
  %329 = vmatprep.subr.bf16.mxu0 0
  %330 = vmatpush1.bf16.msra.mxu0 0
  %331 = vmatprep.subr.bf16.mxu0 0
  %332 = vmatpush1.bf16.msra.mxu0 0
  %333 = vmatprep.mubr.bf16.mxu0 0
  %334 = vmatmul.mubr.bf16.gmra.mrb[0].mxu0 %v296
  %v335 = vpop.f32.mrb[0].mxu0
  %v336 = vadd.f32 0.0, %v335
  %v337 = vpop.f32.mrb[0].mxu0
  %v338 = vpop.f32.mrb[0].mxu0
  %v339 = vadd.f32 0.0, %v338
  %v340 = vpop.f32.mrb[0].mxu0
  %341 = vmatprep.mubr.bf16.mxu0 0
  %342 = vmatmul.mubr.bf16.gmra.mrb[0].mxu0 %v299
  %v343 = vpop.f32.mrb[0].mxu0
  %v344 = vadd.f32 0.0, %v343
  %v345 = vpop.f32.mrb[0].mxu0
  %v346 = vpop.f32.mrb[0].mxu0
  %v347 = vadd.f32 0.0, %v346
  %v348 = vpop.f32.mrb[0].mxu0
  %349 = vdwg.mxu0
  %v350 = vsel %vm48, %v336, %v344
  %v351 = vsel %vm48, %v339, %v347
  %vm352 = vcmp.gt.f32.partialorder %v350, 0.0
  %vm353 = vcmp.gt.f32.partialorder %v351, 0.0
  %v354 = vmin.f32 %v350, 0.0
  %v355 = vmin.f32 %v351, 0.0
  %v356 = vmul.f32 %v354, 1.442695
  %v357 = vpow.pop %v356
  %v358 = vmul.f32 %v355, 1.442695
  %v359 = vpow.pop %v358
  %v360 = vsub.f32 %v357, 1.0
  %v361 = vsub.f32 %v359, 1.0
  %v362 = vsel %vm352, %v350, %v360
  %v363 = vsel %vm353, %v351, %v361
  %v364 = vpack.c.bf16 %v363, %v362
  %v365 = vld [vmem:[%s5] sm:$0xff]
  %v366 = vld [vmem:[%s5 + $0x8] sm:$0xff]
  %v367 = vpack.c.bf16 %v366, %v365
  %v369 = vsel %vm103, %v364, 0
  %371 = vmatprep.subr.bf16.mxu0 0
  %372 = vmatpush1.bf16.msra.mxu0 %v367
  %373 = vmatprep.subr.bf16.mxu0 0
  %374 = vmatpush1.bf16.msra.mxu0 0
  %375 = vmatprep.subr.bf16.mxu0 0
  %376 = vmatpush1.bf16.msra.mxu0 0
  %377 = vmatprep.subr.bf16.mxu0 0
  %378 = vmatpush1.bf16.msra.mxu0 0
  %379 = vmatprep.subr.bf16.mxu0 0
  %380 = vmatpush1.bf16.msra.mxu0 0
  %381 = vmatprep.subr.bf16.mxu0 0
  %382 = vmatpush1.bf16.msra.mxu0 0
  %383 = vmatprep.subr.bf16.mxu0 0
  %384 = vmatpush1.bf16.msra.mxu0 0
  %385 = vmatprep.subr.bf16.mxu0 0
  %386 = vmatpush1.bf16.msra.mxu0 0
  %387 = vmatprep.subr.bf16.mxu0 0
  %388 = vmatpush1.bf16.msra.mxu0 0
  %389 = vmatprep.subr.bf16.mxu0 0
  %390 = vmatpush1.bf16.msra.mxu0 0
  %391 = vmatprep.subr.bf16.mxu0 0
  %392 = vmatpush1.bf16.msra.mxu0 0
  %393 = vmatprep.subr.bf16.mxu0 0
  %394 = vmatpush1.bf16.msra.mxu0 0
  %395 = vmatprep.subr.bf16.mxu0 0
  %396 = vmatpush1.bf16.msra.mxu0 0
  %397 = vmatprep.subr.bf16.mxu0 0
  %398 = vmatpush1.bf16.msra.mxu0 0
  %399 = vmatprep.subr.bf16.mxu0 0
  %400 = vmatpush1.bf16.msra.mxu0 0
  %401 = vmatprep.subr.bf16.mxu0 0
  %402 = vmatpush1.bf16.msra.mxu0 0
  %403 = vmatprep.mubr.bf16.mxu0 0
  %404 = vmatmul.mubr.bf16.gmra.mrb[0].mxu0 %v369
  %v405 = vpop.f32.mrb[0].mxu0
  %v406 = vadd.f32 0.0, %v405
  %v407 = vpop.f32.mrb[0].mxu0
  %v408 = vpop.f32.mrb[0].mxu0
  %v409 = vadd.f32 0.0, %v408
  %v410 = vpop.f32.mrb[0].mxu0
  %411 = vdwg.mxu0
  %v412 = vpack.c.bf16 %v409, %v406
  %v413 = vld [vmem:[%s6] sm:$0x3]
  %v414 = vpack.c.bf16 %v413, %v413
  %v415 = vld [vmem:[%s7] sm:$0xff]
  %v416 = vld [vmem:[%s7 + $0x8] sm:$0xff]
  %v417 = vpack.c.bf16 %v416, %v415
  %v419 = vsel %vm103, %v414, 0
  %v422 = vsel %vm103, %v412, 0
  %424 = vmatprep.subr.bf16.mxu0 0
  %425 = vmatpush1.bf16.xpose.msra.mxu0 %v422
  %426 = vmatprep.subr.bf16.mxu0 0
  %427 = vmatpush1.bf16.xpose.msra.mxu0 0
  %428 = vmatprep.subr.bf16.mxu0 0
  %429 = vmatpush1.bf16.xpose.msra.mxu0 0
  %430 = vmatprep.subr.bf16.mxu0 0
  %431 = vmatpush1.bf16.xpose.msra.mxu0 0
  %432 = vmatprep.subr.bf16.mxu0 0
  %433 = vmatpush1.bf16.xpose.msra.mxu0 0
  %434 = vmatprep.subr.bf16.mxu0 0
  %435 = vmatpush1.bf16.xpose.msra.mxu0 0
  %436 = vmatprep.subr.bf16.mxu0 0
  %437 = vmatpush1.bf16.xpose.msra.mxu0 0
  %438 = vmatprep.subr.bf16.mxu0 0
  %439 = vmatpush1.bf16.xpose.msra.mxu0 0
  %440 = vmatprep.subr.bf16.mxu0 0
  %441 = vmatpush1.bf16.xpose.msra.mxu0 0
  %442 = vmatprep.subr.bf16.mxu0 0
  %443 = vmatpush1.bf16.xpose.msra.mxu0 0
  %444 = vmatprep.subr.bf16.mxu0 0
  %445 = vmatpush1.bf16.xpose.msra.mxu0 0
  %446 = vmatprep.subr.bf16.mxu0 0
  %447 = vmatpush1.bf16.xpose.msra.mxu0 0
  %448 = vmatprep.subr.bf16.mxu0 0
  %449 = vmatpush1.bf16.xpose.msra.mxu0 0
  %450 = vmatprep.subr.bf16.mxu0 0
  %451 = vmatpush1.bf16.xpose.msra.mxu0 0
  %452 = vmatprep.subr.bf16.mxu0 0
  %453 = vmatpush1.bf16.xpose.msra.mxu0 0
  %454 = vmatprep.subr.bf16.mxu0 0
  %455 = vmatpush1.bf16.xpose.msra.mxu0 0
  %456 = vmatprep.mubr.bf16.mxu0 0
  %457 = vmatmul.mubr.bf16.gmra.mrb[0].mxu0 %v419
  %v458 = vpop.f32.mrb[0].mxu0
  %v459 = vadd.f32 0.0, %v458
  %v460 = vpop.f32.mrb[0].mxu0
  %v461 = vpop.f32.mrb[0].mxu0
  %v462 = vpop.f32.mrb[0].mxu0
  %463 = vdwg.mxu0
  %464 = vmatprep.subr.bf16.mxu0 0
  %465 = vmatpush1.bf16.msra.mxu0 %v417
  %466 = vmatprep.subr.bf16.mxu0 0
  %467 = vmatpush1.bf16.msra.mxu0 0
  %468 = vmatprep.subr.bf16.mxu0 0
  %469 = vmatpush1.bf16.msra.mxu0 0
  %470 = vmatprep.subr.bf16.mxu0 0
  %471 = vmatpush1.bf16.msra.mxu0 0
  %472 = vmatprep.subr.bf16.mxu0 0
  %473 = vmatpush1.bf16.msra.mxu0 0
  %474 = vmatprep.subr.bf16.mxu0 0
  %475 = vmatpush1.bf16.msra.mxu0 0
  %476 = vmatprep.subr.bf16.mxu0 0
  %477 = vmatpush1.bf16.msra.mxu0 0
  %478 = vmatprep.subr.bf16.mxu0 0
  %479 = vmatpush1.bf16.msra.mxu0 0
  %480 = vmatprep.subr.bf16.mxu0 0
  %481 = vmatpush1.bf16.msra.mxu0 0
  %482 = vmatprep.subr.bf16.mxu0 0
  %483 = vmatpush1.bf16.msra.mxu0 0
  %484 = vmatprep.subr.bf16.mxu0 0
  %485 = vmatpush1.bf16.msra.mxu0 0
  %486 = vmatprep.subr.bf16.mxu0 0
  %487 = vmatpush1.bf16.msra.mxu0 0
  %488 = vmatprep.subr.bf16.mxu0 0
  %489 = vmatpush1.bf16.msra.mxu0 0
  %490 = vmatprep.subr.bf16.mxu0 0
  %491 = vmatpush1.bf16.msra.mxu0 0
  %492 = vmatprep.subr.bf16.mxu0 0
  %493 = vmatpush1.bf16.msra.mxu0 0
  %494 = vmatprep.subr.bf16.mxu0 0
  %495 = vmatpush1.bf16.msra.mxu0 0
  %496 = vmatprep.mubr.bf16.mxu0 0
  %497 = vmatmul.mubr.bf16.gmra.mrb[0].mxu0 %v422
  %v498 = vpop.f32.mrb[0].mxu0
  %v499 = vadd.f32 0.0, %v498
  %v500 = vpop.f32.mrb[0].mxu0
  %v501 = vpop.f32.mrb[0].mxu0
  %v502 = vadd.f32 0.0, %v501
  %v503 = vpop.f32.mrb[0].mxu0
  %504 = vdwg.mxu0
  %v505 = vlaneseq
  %v506 = vshrl.u32 %v505, 7
  %v507 = vsub.s32 0, %v506
  %v508 = vrot.slane %v459, %v507
  %v509 = vlaneseq
  %v510 = vshrl.u32 %v509, 7
  %v511 = vsub.s32 1, %v510
  %v512 = vrot.slane %v459, %v511
  %515 = vrot.lane.b32.xlu0 %v499, 127
  %v516 = vpop.permute.xlu0 %515
  %517 = vrot.lane.b32.xlu0 %v502, 127
  %v518 = vpop.permute.xlu0 %517
  %519 = vset.pattern.permute.xlu0 0
  %520 = vperm.xlu0 %519, %v499
  %v521 = vpop.permute.xlu0 %520
  %523 = vset.pattern.permute.xlu0 0
  %524 = vperm.xlu0 %523, %v502
  %v525 = vpop.permute.xlu0 %524
  %527 = vset.pattern.permute.xlu0 0
  %528 = vperm.xlu0 %527, %v516
  %v529 = vpop.permute.xlu0 %528
  %531 = vset.pattern.permute.xlu0 0
  %532 = vperm.xlu0 %531, %v518
  %v533 = vpop.permute.xlu0 %532
  %v535 = vadd.f32 %v508, %v521
  %v536 = vadd.f32 %v508, %v525
  %v537 = vadd.f32 %v512, %v529
  %v538 = vadd.f32 %v512, %v533
  %vm539 = vcmp.gt.f32.partialorder %v535, 0.0
  %vm540 = vcmp.gt.f32.partialorder %v536, 0.0
  %vm541 = vcmp.gt.f32.partialorder %v537, 0.0
  %vm542 = vcmp.gt.f32.partialorder %v538, 0.0
  %v543 = vmul.f32 %v535, 0.2
  %v544 = vmul.f32 %v536, 0.2
  %v545 = vmul.f32 %v537, 0.2
  %v546 = vmul.f32 %v538, 0.2
  %v547 = vsel %vm539, %v535, %v543
  %v548 = vsel %vm540, %v536, %v544
  %v549 = vsel %vm541, %v537, %v545
  %v550 = vsel %vm542, %v538, %v546
  %v551 = vsel %vm41, %v547, -1e+30
  %v552 = vsel %vm42, %v548, -1e+30
  %v553 = vsel %vm41, %v549, -1e+30
  %v554 = vsel %vm42, %v550, -1e+30
  %v555 = vsel %vm103, %v551, -inf
  %556 = vmax.xlane.f32.xlu0 %v555
  %v557 = vpop.xlane.xlu0 %556
  %v558 = vsel %vm103, %v552, -inf
  %559 = vmax.xlane.f32.xlu0 %v558
  %v560 = vpop.xlane.xlu0 %559
  %v561 = vsel %vm103, %v553, -inf
  %562 = vmax.xlane.f32.xlu0 %v561
  %v563 = vpop.xlane.xlu0 %562
  %v564 = vsel %vm103, %v554, -inf
  %565 = vmax.xlane.f32.xlu0 %v564
  %v566 = vpop.xlane.xlu0 %565
  %v567 = vsub.f32 %v551, %v557
  %v568 = vsub.f32 %v552, %v560
  %v569 = vsub.f32 %v553, %v563
  %v570 = vsub.f32 %v554, %v566
  %v571 = vmul.f32 %v567, 1.442695
  %v572 = vpow.pop %v571
  %v573 = vmul.f32 %v568, 1.442695
  %v574 = vpow.pop %v573
  %v575 = vmul.f32 %v569, 1.442695
  %v576 = vpow.pop %v575
  %v577 = vmul.f32 %v570, 1.442695
  %v578 = vpow.pop %v577
  %v579 = vsel %vm41, %v572, 0.0
  %v580 = vsel %vm42, %v574, 0.0
  %v581 = vsel %vm41, %v576, 0.0
  %v582 = vsel %vm42, %v578, 0.0
  %v583 = vsel %vm103, %v579, 0.0
  %584 = vadd.xlane.f32.xlu0 %v583
  %v585 = vpop.xlane.xlu0 %584
  %v586 = vsel %vm103, %v580, 0.0
  %587 = vadd.xlane.f32.xlu0 %v586
  %v588 = vpop.xlane.xlu0 %587
  %v589 = vsel %vm103, %v581, 0.0
  %590 = vadd.xlane.f32.xlu0 %v589
  %v591 = vpop.xlane.xlu0 %590
  %v592 = vsel %vm103, %v582, 0.0
  %593 = vadd.xlane.f32.xlu0 %v592
  %v594 = vpop.xlane.xlu0 %593
  %v595 = vmax.f32 %v585, 1e-20
  %v596 = vmax.f32 %v588, 1e-20
  %v597 = vmax.f32 %v591, 1e-20
  %v598 = vmax.f32 %v594, 1e-20
  %v599 = vrcp.pop %v595
  %v600 = vrcp.pop %v596
  %v601 = vrcp.pop %v597
  %v602 = vrcp.pop %v598
  %v603 = vmul.f32 %v579, %v599
  %v604 = vmul.f32 %v580, %v600
  %v605 = vmul.f32 %v581, %v601
  %v606 = vmul.f32 %v582, %v602
  %v607 = vpack.c.bf16 %v604, %v603
  %v608 = vpack.c.bf16 %v606, %v605
  %v610 = vsel %vm103, %v607, 0
  %v613 = vsel %vm103, %v608, 0
  %615 = vmatprep.subr.bf16.mxu0 0
  %616 = vmatpush1.bf16.msra.mxu0 %v412
  %617 = vmatprep.subr.bf16.mxu0 0
  %618 = vmatpush1.bf16.msra.mxu0 0
  %619 = vmatprep.subr.bf16.mxu0 0
  %620 = vmatpush1.bf16.msra.mxu0 0
  %621 = vmatprep.subr.bf16.mxu0 0
  %622 = vmatpush1.bf16.msra.mxu0 0
  %623 = vmatprep.subr.bf16.mxu0 0
  %624 = vmatpush1.bf16.msra.mxu0 0
  %625 = vmatprep.subr.bf16.mxu0 0
  %626 = vmatpush1.bf16.msra.mxu0 0
  %627 = vmatprep.subr.bf16.mxu0 0
  %628 = vmatpush1.bf16.msra.mxu0 0
  %629 = vmatprep.subr.bf16.mxu0 0
  %630 = vmatpush1.bf16.msra.mxu0 0
  %631 = vmatprep.subr.bf16.mxu0 0
  %632 = vmatpush1.bf16.msra.mxu0 0
  %633 = vmatprep.subr.bf16.mxu0 0
  %634 = vmatpush1.bf16.msra.mxu0 0
  %635 = vmatprep.subr.bf16.mxu0 0
  %636 = vmatpush1.bf16.msra.mxu0 0
  %637 = vmatprep.subr.bf16.mxu0 0
  %638 = vmatpush1.bf16.msra.mxu0 0
  %639 = vmatprep.subr.bf16.mxu0 0
  %640 = vmatpush1.bf16.msra.mxu0 0
  %641 = vmatprep.subr.bf16.mxu0 0
  %642 = vmatpush1.bf16.msra.mxu0 0
  %643 = vmatprep.subr.bf16.mxu0 0
  %644 = vmatpush1.bf16.msra.mxu0 0
  %645 = vmatprep.subr.bf16.mxu0 0
  %646 = vmatpush1.bf16.msra.mxu0 0
  %647 = vmatprep.mubr.bf16.mxu0 0
  %648 = vmatmul.mubr.bf16.gmra.mrb[0].mxu0 %v610
  %v649 = vpop.f32.mrb[0].mxu0
  %v650 = vadd.f32 0.0, %v649
  %v651 = vpop.f32.mrb[0].mxu0
  %v652 = vpop.f32.mrb[0].mxu0
  %v653 = vadd.f32 0.0, %v652
  %v654 = vpop.f32.mrb[0].mxu0
  %655 = vmatprep.mubr.bf16.mxu0 0
  %656 = vmatmul.mubr.bf16.gmra.mrb[0].mxu0 %v613
  %v657 = vpop.f32.mrb[0].mxu0
  %v658 = vadd.f32 0.0, %v657
  %v659 = vpop.f32.mrb[0].mxu0
  %v660 = vpop.f32.mrb[0].mxu0
  %v661 = vadd.f32 0.0, %v660
  %v662 = vpop.f32.mrb[0].mxu0
  %663 = vdwg.mxu0
  %v664 = vsel %vm48, %v650, %v658
  %v665 = vsel %vm48, %v653, %v661
  %vm666 = vcmp.gt.f32.partialorder %v664, 0.0
  %vm667 = vcmp.gt.f32.partialorder %v665, 0.0
  %v668 = vmin.f32 %v664, 0.0
  %v669 = vmin.f32 %v665, 0.0
  %v670 = vmul.f32 %v668, 1.442695
  %v671 = vpow.pop %v670
  %v672 = vmul.f32 %v669, 1.442695
  %v673 = vpow.pop %v672
  %v674 = vsub.f32 %v671, 1.0
  %v675 = vsub.f32 %v673, 1.0
  %v676 = vsel %vm666, %v664, %v674
  %v677 = vsel %vm667, %v665, %v675
  %v678 = vpack.c.bf16 %v677, %v676
  %v679 = vld [vmem:[%s8] sm:$0xff]
  %v680 = vld [vmem:[%s8 + $0x8] sm:$0xff]
  %v681 = vpack.c.bf16 %v680, %v679
  %v683 = vsel %vm103, %v678, 0
  %685 = vmatprep.subr.bf16.mxu0 0
  %686 = vmatpush1.bf16.msra.mxu0 %v681
  %687 = vmatprep.subr.bf16.mxu0 0
  %688 = vmatpush1.bf16.msra.mxu0 0
  %689 = vmatprep.subr.bf16.mxu0 0
  %690 = vmatpush1.bf16.msra.mxu0 0
  %691 = vmatprep.subr.bf16.mxu0 0
  %692 = vmatpush1.bf16.msra.mxu0 0
  %693 = vmatprep.subr.bf16.mxu0 0
  %694 = vmatpush1.bf16.msra.mxu0 0
  %695 = vmatprep.subr.bf16.mxu0 0
  %696 = vmatpush1.bf16.msra.mxu0 0
  %697 = vmatprep.subr.bf16.mxu0 0
  %698 = vmatpush1.bf16.msra.mxu0 0
  %699 = vmatprep.subr.bf16.mxu0 0
  %700 = vmatpush1.bf16.msra.mxu0 0
  %701 = vmatprep.subr.bf16.mxu0 0
  %702 = vmatpush1.bf16.msra.mxu0 0
  %703 = vmatprep.subr.bf16.mxu0 0
  %704 = vmatpush1.bf16.msra.mxu0 0
  %705 = vmatprep.subr.bf16.mxu0 0
  %706 = vmatpush1.bf16.msra.mxu0 0
  %707 = vmatprep.subr.bf16.mxu0 0
  %708 = vmatpush1.bf16.msra.mxu0 0
  %709 = vmatprep.subr.bf16.mxu0 0
  %710 = vmatpush1.bf16.msra.mxu0 0
  %711 = vmatprep.subr.bf16.mxu0 0
  %712 = vmatpush1.bf16.msra.mxu0 0
  %713 = vmatprep.subr.bf16.mxu0 0
  %714 = vmatpush1.bf16.msra.mxu0 0
  %715 = vmatprep.subr.bf16.mxu0 0
  %716 = vmatpush1.bf16.msra.mxu0 0
  %717 = vmatprep.mubr.bf16.mxu0 0
  %718 = vmatmul.mubr.bf16.gmra.mrb[0].mxu0 %v683
  %v719 = vpop.f32.mrb[0].mxu0
  %v720 = vadd.f32 0.0, %v719
  %v721 = vpop.f32.mrb[0].mxu0
  %v722 = vpop.f32.mrb[0].mxu0
  %v723 = vadd.f32 0.0, %v722
  %v724 = vpop.f32.mrb[0].mxu0
  %725 = vdwg.mxu0
  %v726 = vpack.c.bf16 %v723, %v720
  %v727 = vld [vmem:[%s9] sm:$0x3]
  %v728 = vpack.c.bf16 %v727, %v727
  %v729 = vld [vmem:[%s10] sm:$0xff]
  %v730 = vld [vmem:[%s10 + $0x8] sm:$0x3]
  %v731 = vpack.c.bf16 %v730, %v729
  %vm732 = vcmask 80896
  %v734 = vsel %vm732, %v728, 0
  %v737 = vsel %vm732, %v726, 0
  %739 = vmatprep.subr.bf16.mxu0 0
  %740 = vmatpush1.bf16.xpose.msra.mxu0 %v737
  %741 = vmatprep.subr.bf16.mxu0 0
  %742 = vmatpush1.bf16.xpose.msra.mxu0 0
  %743 = vmatprep.subr.bf16.mxu0 0
  %744 = vmatpush1.bf16.xpose.msra.mxu0 0
  %745 = vmatprep.subr.bf16.mxu0 0
  %746 = vmatpush1.bf16.xpose.msra.mxu0 0
  %747 = vmatprep.subr.bf16.mxu0 0
  %748 = vmatpush1.bf16.xpose.msra.mxu0 0
  %749 = vmatprep.subr.bf16.mxu0 0
  %750 = vmatpush1.bf16.xpose.msra.mxu0 0
  %751 = vmatprep.subr.bf16.mxu0 0
  %752 = vmatpush1.bf16.xpose.msra.mxu0 0
  %753 = vmatprep.subr.bf16.mxu0 0
  %754 = vmatpush1.bf16.xpose.msra.mxu0 0
  %755 = vmatprep.subr.bf16.mxu0 0
  %756 = vmatpush1.bf16.xpose.msra.mxu0 0
  %757 = vmatprep.subr.bf16.mxu0 0
  %758 = vmatpush1.bf16.xpose.msra.mxu0 0
  %759 = vmatprep.subr.bf16.mxu0 0
  %760 = vmatpush1.bf16.xpose.msra.mxu0 0
  %761 = vmatprep.subr.bf16.mxu0 0
  %762 = vmatpush1.bf16.xpose.msra.mxu0 0
  %763 = vmatprep.subr.bf16.mxu0 0
  %764 = vmatpush1.bf16.xpose.msra.mxu0 0
  %765 = vmatprep.subr.bf16.mxu0 0
  %766 = vmatpush1.bf16.xpose.msra.mxu0 0
  %767 = vmatprep.subr.bf16.mxu0 0
  %768 = vmatpush1.bf16.xpose.msra.mxu0 0
  %769 = vmatprep.subr.bf16.mxu0 0
  %770 = vmatpush1.bf16.xpose.msra.mxu0 0
  %771 = vmatprep.mubr.bf16.mxu0 0
  %772 = vmatmul.mubr.bf16.gmra.mrb[0].mxu0 %v734
  %v773 = vpop.f32.mrb[0].mxu0
  %v774 = vadd.f32 0.0, %v773
  %v775 = vpop.f32.mrb[0].mxu0
  %v776 = vpop.f32.mrb[0].mxu0
  %v777 = vpop.f32.mrb[0].mxu0
  %778 = vdwg.mxu0
  %vm779 = vcmask 1044480
  %v781 = vsel %vm779, %v731, 0
  %783 = vmatprep.subr.bf16.mxu0 0
  %784 = vmatpush1.bf16.msra.mxu0 %v781
  %785 = vmatprep.subr.bf16.mxu0 0
  %786 = vmatpush1.bf16.msra.mxu0 0
  %787 = vmatprep.subr.bf16.mxu0 0
  %788 = vmatpush1.bf16.msra.mxu0 0
  %789 = vmatprep.subr.bf16.mxu0 0
  %790 = vmatpush1.bf16.msra.mxu0 0
  %791 = vmatprep.subr.bf16.mxu0 0
  %792 = vmatpush1.bf16.msra.mxu0 0
  %793 = vmatprep.subr.bf16.mxu0 0
  %794 = vmatpush1.bf16.msra.mxu0 0
  %795 = vmatprep.subr.bf16.mxu0 0
  %796 = vmatpush1.bf16.msra.mxu0 0
  %797 = vmatprep.subr.bf16.mxu0 0
  %798 = vmatpush1.bf16.msra.mxu0 0
  %799 = vmatprep.subr.bf16.mxu0 0
  %800 = vmatpush1.bf16.msra.mxu0 0
  %801 = vmatprep.subr.bf16.mxu0 0
  %802 = vmatpush1.bf16.msra.mxu0 0
  %803 = vmatprep.subr.bf16.mxu0 0
  %804 = vmatpush1.bf16.msra.mxu0 0
  %805 = vmatprep.subr.bf16.mxu0 0
  %806 = vmatpush1.bf16.msra.mxu0 0
  %807 = vmatprep.subr.bf16.mxu0 0
  %808 = vmatpush1.bf16.msra.mxu0 0
  %809 = vmatprep.subr.bf16.mxu0 0
  %810 = vmatpush1.bf16.msra.mxu0 0
  %811 = vmatprep.subr.bf16.mxu0 0
  %812 = vmatpush1.bf16.msra.mxu0 0
  %813 = vmatprep.subr.bf16.mxu0 0
  %814 = vmatpush1.bf16.msra.mxu0 0
  %815 = vmatprep.mubr.bf16.mxu0 0
  %816 = vmatmul.mubr.bf16.gmra.mrb[0].mxu0 %v737
  %v817 = vpop.f32.mrb[0].mxu0
  %v818 = vadd.f32 0.0, %v817
  %v819 = vpop.f32.mrb[0].mxu0
  %v820 = vpop.f32.mrb[0].mxu0
  %v821 = vadd.f32 0.0, %v820
  %v822 = vpop.f32.mrb[0].mxu0
  %823 = vdwg.mxu0
  %v824 = vlaneseq
  %v825 = vshrl.u32 %v824, 7
  %v826 = vsub.s32 0, %v825
  %v827 = vrot.slane %v774, %v826
  %v828 = vlaneseq
  %v829 = vshrl.u32 %v828, 7
  %v830 = vsub.s32 1, %v829
  %v831 = vrot.slane %v774, %v830
  %834 = vrot.lane.b32.xlu0 %v818, 127
  %v835 = vpop.permute.xlu0 %834
  %836 = vrot.lane.b32.xlu0 %v821, 127
  %v837 = vpop.permute.xlu0 %836
  %838 = vset.pattern.permute.xlu0 0
  %839 = vperm.xlu0 %838, %v818
  %v840 = vpop.permute.xlu0 %839
  %842 = vset.pattern.permute.xlu0 0
  %843 = vperm.xlu0 %842, %v821
  %v844 = vpop.permute.xlu0 %843
  %846 = vset.pattern.permute.xlu0 0
  %847 = vperm.xlu0 %846, %v835
  %v848 = vpop.permute.xlu0 %847
  %850 = vset.pattern.permute.xlu0 0
  %851 = vperm.xlu0 %850, %v837
  %v852 = vpop.permute.xlu0 %851
  %v854 = vadd.f32 %v827, %v840
  %v855 = vadd.f32 %v827, %v844
  %v856 = vadd.f32 %v831, %v848
  %v857 = vadd.f32 %v831, %v852
  %vm858 = vcmp.gt.f32.partialorder %v854, 0.0
  %vm859 = vcmp.gt.f32.partialorder %v855, 0.0
  %vm860 = vcmp.gt.f32.partialorder %v856, 0.0
  %vm861 = vcmp.gt.f32.partialorder %v857, 0.0
  %v862 = vmul.f32 %v854, 0.2
  %v863 = vmul.f32 %v855, 0.2
  %v864 = vmul.f32 %v856, 0.2
  %v865 = vmul.f32 %v857, 0.2
  %v866 = vsel %vm858, %v854, %v862
  %v867 = vsel %vm859, %v855, %v863
  %v868 = vsel %vm860, %v856, %v864
  %v869 = vsel %vm861, %v857, %v865
  %v870 = vsel %vm41, %v866, -1e+30
  %v871 = vsel %vm42, %v867, -1e+30
  %v872 = vsel %vm41, %v868, -1e+30
  %v873 = vsel %vm42, %v869, -1e+30
  %v874 = vsel %vm103, %v870, -inf
  %875 = vmax.xlane.f32.xlu0 %v874
  %v876 = vpop.xlane.xlu0 %875
  %v877 = vsel %vm103, %v871, -inf
  %878 = vmax.xlane.f32.xlu0 %v877
  %v879 = vpop.xlane.xlu0 %878
  %v880 = vsel %vm103, %v872, -inf
  %881 = vmax.xlane.f32.xlu0 %v880
  %v882 = vpop.xlane.xlu0 %881
  %v883 = vsel %vm103, %v873, -inf
  %884 = vmax.xlane.f32.xlu0 %v883
  %v885 = vpop.xlane.xlu0 %884
  %v886 = vsub.f32 %v870, %v876
  %v887 = vsub.f32 %v871, %v879
  %v888 = vsub.f32 %v872, %v882
  %v889 = vsub.f32 %v873, %v885
  %v890 = vmul.f32 %v886, 1.442695
  %v891 = vpow.pop %v890
  %v892 = vmul.f32 %v887, 1.442695
  %v893 = vpow.pop %v892
  %v894 = vmul.f32 %v888, 1.442695
  %v895 = vpow.pop %v894
  %v896 = vmul.f32 %v889, 1.442695
  %v897 = vpow.pop %v896
  %v898 = vsel %vm41, %v891, 0.0
  %v899 = vsel %vm42, %v893, 0.0
  %v900 = vsel %vm41, %v895, 0.0
  %v901 = vsel %vm42, %v897, 0.0
  %v902 = vsel %vm103, %v898, 0.0
  %903 = vadd.xlane.f32.xlu0 %v902
  %v904 = vpop.xlane.xlu0 %903
  %v905 = vsel %vm103, %v899, 0.0
  %906 = vadd.xlane.f32.xlu0 %v905
  %v907 = vpop.xlane.xlu0 %906
  %v908 = vsel %vm103, %v900, 0.0
  %909 = vadd.xlane.f32.xlu0 %v908
  %v910 = vpop.xlane.xlu0 %909
  %v911 = vsel %vm103, %v901, 0.0
  %912 = vadd.xlane.f32.xlu0 %v911
  %v913 = vpop.xlane.xlu0 %912
  %v914 = vmax.f32 %v904, 1e-20
  %v915 = vmax.f32 %v907, 1e-20
  %v916 = vmax.f32 %v910, 1e-20
  %v917 = vmax.f32 %v913, 1e-20
  %v918 = vrcp.pop %v914
  %v919 = vrcp.pop %v915
  %v920 = vrcp.pop %v916
  %v921 = vrcp.pop %v917
  %v922 = vmul.f32 %v898, %v918
  %v923 = vmul.f32 %v899, %v919
  %v924 = vmul.f32 %v900, %v920
  %v925 = vmul.f32 %v901, %v921
  %v926 = vpack.c.bf16 %v923, %v922
  %v927 = vpack.c.bf16 %v925, %v924
  %v929 = vsel %vm103, %v926, 0
  %v932 = vsel %vm103, %v927, 0
  %934 = vmatprep.subr.bf16.mxu0 0
  %935 = vmatpush1.bf16.msra.mxu0 %v726
  %936 = vmatprep.subr.bf16.mxu0 0
  %937 = vmatpush1.bf16.msra.mxu0 0
  %938 = vmatprep.subr.bf16.mxu0 0
  %939 = vmatpush1.bf16.msra.mxu0 0
  %940 = vmatprep.subr.bf16.mxu0 0
  %941 = vmatpush1.bf16.msra.mxu0 0
  %942 = vmatprep.subr.bf16.mxu0 0
  %943 = vmatpush1.bf16.msra.mxu0 0
  %944 = vmatprep.subr.bf16.mxu0 0
  %945 = vmatpush1.bf16.msra.mxu0 0
  %946 = vmatprep.subr.bf16.mxu0 0
  %947 = vmatpush1.bf16.msra.mxu0 0
  %948 = vmatprep.subr.bf16.mxu0 0
  %949 = vmatpush1.bf16.msra.mxu0 0
  %950 = vmatprep.subr.bf16.mxu0 0
  %951 = vmatpush1.bf16.msra.mxu0 0
  %952 = vmatprep.subr.bf16.mxu0 0
  %953 = vmatpush1.bf16.msra.mxu0 0
  %954 = vmatprep.subr.bf16.mxu0 0
  %955 = vmatpush1.bf16.msra.mxu0 0
  %956 = vmatprep.subr.bf16.mxu0 0
  %957 = vmatpush1.bf16.msra.mxu0 0
  %958 = vmatprep.subr.bf16.mxu0 0
  %959 = vmatpush1.bf16.msra.mxu0 0
  %960 = vmatprep.subr.bf16.mxu0 0
  %961 = vmatpush1.bf16.msra.mxu0 0
  %962 = vmatprep.subr.bf16.mxu0 0
  %963 = vmatpush1.bf16.msra.mxu0 0
  %964 = vmatprep.subr.bf16.mxu0 0
  %965 = vmatpush1.bf16.msra.mxu0 0
  %966 = vmatprep.mubr.bf16.mxu0 0
  %967 = vmatmul.mubr.bf16.gmra.mrb[0].mxu0 %v929
  %v968 = vpop.f32.mrb[0].mxu0
  %v969 = vadd.f32 0.0, %v968
  %v970 = vpop.f32.mrb[0].mxu0
  %v971 = vpop.f32.mrb[0].mxu0
  %v972 = vadd.f32 0.0, %v971
  %v973 = vpop.f32.mrb[0].mxu0
  %974 = vmatprep.mubr.bf16.mxu0 0
  %975 = vmatmul.mubr.bf16.gmra.mrb[0].mxu0 %v932
  %v976 = vpop.f32.mrb[0].mxu0
  %v977 = vadd.f32 0.0, %v976
  %v978 = vpop.f32.mrb[0].mxu0
  %v979 = vpop.f32.mrb[0].mxu0
  %v980 = vadd.f32 0.0, %v979
  %v981 = vpop.f32.mrb[0].mxu0
  %982 = vdwg.mxu0
  %vm983 = vcmask 39936
  %v984 = vsel %vm983, %v969, %v977
  %v985 = vsel %vm983, %v972, %v980
  %988 = vrot.lane.b32.xlu0 %v984, 123
  %v989 = vpop.permute.xlu0 %988
  %990 = vrot.lane.b32.xlu0 %v985, 123
  %v991 = vpop.permute.xlu0 %990
  %v994 = vadd.f32 %v984, %v989
  %v995 = vadd.f32 %v985, %v991
  %v996 = vmul.f32 %v994, 0.5
  %v997 = vmul.f32 %v995, 0.5
  %998 = vst.msk [vmem:[%s11] sm:$0xff] %vm983, %v996
  %999 = vst.msk [vmem:[%s11 + $0x8] sm:$0xff] %vm983, %v997
  // Predicated region
  $region46: #{tpu_custom_call.1} parent=0 // pred_check
    _
  $region47: #{tpu_custom_call.1} parent=0 // pred_check_branch
    %1001 = sbr.rel (0) target = $region49
  $region48: #{tpu_custom_call.1} parent=0 // pred_region
    _
  $region49: #{tpu_custom_call.1} parent=0 // pred_fallthru
    _
  // Predicated region
  $region50: #{tpu_custom_call.1} parent=0 // pred_check
    _
  $region51: #{tpu_custom_call.1} parent=0 // pred_check_branch
    %1003 = sbr.rel (0) target = $region53
  $region52: #{tpu_custom_call.1} parent=0 // pred_region
    _
  $region53: #{tpu_custom_call.1} parent=0 // pred_fallthru
    _

</llo_original>
